<compile_context>
chip_gen: v5e
topology: v5e:2x2
jax: 0.10.0
libtpu: 0.0.40
codegen_flags: <defaults>
</compile_context>

<pallas_src>
import jax
import jax.numpy as jnp
from jax.experimental import pallas as pl
from jax.experimental.pallas import tpu as pltpu


def _add_bias_kernel(x_ref, b_ref, o_ref):
    # Elementwise broadcast add on the VPU; promotion + final cast happen
    # in-register.
    o_ref[...] = (x_ref[...] + b_ref[...]).astype(o_ref.dtype)


def _pick_tile(dim: int, target: int, align: int) -> int:
    """Tile extent for one axis.

    Small dims use the full extent (always a legal block shape).  Large dims
    use a fixed `align`-multiple tile <= target and rely on cdiv-grid boundary
    masking, so VMEM per step is bounded for every input shape.
    """
    if dim <= target:
        return dim
    return max(align, (target // align) * align)


def _default_tile_cols() -> int:
    """Lane-tile target: ~4 MiB/step on v7x (fast HBM), ~2 MiB elsewhere."""
    try:
        kind = jax.devices()[0].device_kind.lower()
    except Exception:  # pragma: no cover - conservative default
        kind = ""
    return 2048 if "v7" in kind else 1024


def _tiled_bias_add_2d(x2d, b2d, *, bias_along_lanes: bool, donate_x: bool = False):
    """x2d: (R, L).  b2d: (1, L) if bias_along_lanes else (R, 1)."""
    R, L = x2d.shape
    out_dtype = jnp.result_type(x2d.dtype, b2d.dtype)

    itemsize = jnp.dtype(x2d.dtype).itemsize
    sub_align = max(8, 32 // max(itemsize, 1))   # 8 f32 / 16 bf16 / 32 int8-fp8
    tr = _pick_tile(R, 512, sub_align)           # sublane tile
    tl = _pick_tile(L, _default_tile_cols(), 128)  # lane tile (lane-dense stores)

    if bias_along_lanes:
        # bias (1, L): put the lane-tile axis OUTER so the (1, tl) bias block
        # is invariant along the inner axis -> Pallas keeps it resident.
        grid = (pl.cdiv(L, tl), pl.cdiv(R, tr))
        x_spec = pl.BlockSpec((tr, tl), lambda j, i: (i, j))
        b_spec = pl.BlockSpec((1, tl), lambda j, i: (0, j))
        o_spec = pl.BlockSpec((tr, tl), lambda j, i: (i, j))
    else:
        # bias (R, 1): put the row-tile axis OUTER so the (tr, 1) bias block
        # is invariant along the inner (lane) axis -> resident.
        grid = (pl.cdiv(R, tr), pl.cdiv(L, tl))
        x_spec = pl.BlockSpec((tr, tl), lambda i, j: (i, j))
        b_spec = pl.BlockSpec((tr, 1), lambda i, j: (i, 0))
        o_spec = pl.BlockSpec((tr, tl), lambda i, j: (i, j))

    extra = {}
    if donate_x and out_dtype == x2d.dtype:
        extra["input_output_aliases"] = {0: 0}   # reuse x's HBM buffer

    return pl.pallas_call(
        _add_bias_kernel,
        out_shape=jax.ShapeDtypeStruct((R, L), out_dtype),
        grid=grid,
        in_specs=[x_spec, b_spec],
        out_specs=o_spec,
        compiler_params=pltpu.CompilerParams(
            dimension_semantics=("parallel", "parallel"),
        ),
        **extra,
    )(x2d, b2d)


def add_bias_2d(x, bias_param, *, donate_x=False):
    """x: (N, C), bias_param: (C, 1) or (C,). Returns x + bias broadcast over rows."""
    N, C = x.shape
    b_row = bias_param.reshape(1, C)                      # glue: (C,1) -> (1,C)
    return _tiled_bias_add_2d(x, b_row, bias_along_lanes=True, donate_x=donate_x)


def add_bias_4d(x, bias_param, *, donate_x=False):
    """x: (N, C, H, W) NCHW, bias_param: (C, 1) or (C,). Returns x + per-channel bias."""
    N, C, H, W = x.shape
    x_flat = x.reshape(N * C, H * W)                      # lane dim = H*W (dense)
    # Per-row bias column: row r = (n, c) gets bias[c].  Tiny (N*C elements).
    b_col = jnp.broadcast_to(bias_param.reshape(1, C), (N, C)).reshape(N * C, 1)
    out_flat = _tiled_bias_add_2d(
        x_flat, b_col, bias_along_lanes=False, donate_x=donate_x)
    return out_flat.reshape(N, C, H, W)


def add_bias(x, bias_param, *, donate_x=False):
    if x.ndim == 2:
        return add_bias_2d(x, bias_param, donate_x=donate_x)
    elif x.ndim == 4:
        return add_bias_4d(x, bias_param, donate_x=donate_x)
    else:
        raise ValueError(f"AddBias expects 2D or 4D input, got ndim={x.ndim}")


if __name__ == "__main__":
    key = jax.random.PRNGKey(0)
    k_bias, k_x4, k_x2, k_bias_l, k_x2l, k_x4l, k_xb = jax.random.split(key, 7)

    # --- Small shapes matching the module's typical usage ------------------
    N, C, H, W = 2, 4, 16, 16
    bias_vec = jax.random.normal(k_bias, (C,), dtype=jnp.float32)
    bias_param = bias_vec[:, None]                         # (C, 1), like unsqueeze(1)

    # 4D (conv-style NCHW) path
    x4 = jax.random.normal(k_x4, (N, C, H, W), dtype=jnp.float32)
    out4 = jax.block_until_ready(add_bias(x4, bias_param))
    ref4 = x4 + bias_vec.reshape(1, C, 1, 1)
    assert out4.shape == x4.shape and out4.dtype == x4.dtype
    assert jnp.allclose(out4, ref4, atol=1e-6), "4D mismatch"

    # 2D (linear-style) path
    x2 = jax.random.normal(k_x2, (N, C), dtype=jnp.float32)
    out2 = jax.block_until_ready(add_bias(x2, bias_param))
    ref2 = x2 + bias_vec.reshape(1, C)
    assert out2.shape == x2.shape and out2.dtype == x2.dtype
    assert jnp.allclose(out2, ref2, atol=1e-6), "2D mismatch"

    # --- Larger, non-divisible shapes: exercise cdiv-grid boundary masking --
    # 2D: (1000, 1300) -> tiles (512, 1024), grid (2, 2), both axes partial.
    C_l = 1300
    bias_l = jax.random.normal(k_bias_l, (C_l,), dtype=jnp.float32)
    x2_l = jax.random.normal(k_x2l, (1000, C_l), dtype=jnp.float32)
    out2_l = jax.block_until_ready(add_bias(x2_l, bias_l[:, None]))
    assert jnp.allclose(out2_l, x2_l + bias_l.reshape(1, C_l), atol=1e-6), \
        "2D tiled/masked mismatch"

    # 4D: (2, 16, 60, 60) -> flat (32, 3600), lane tiles of 1024 with a partial tail.
    C_4 = 16
    bias_4 = jax.random.normal(k_bias, (C_4,), dtype=jnp.float32)
    x4_l = jax.random.normal(k_x4l, (2, C_4, 60, 60), dtype=jnp.float32)
    out4_l = jax.block_until_ready(add_bias(x4_l, bias_4[:, None]))
    assert jnp.allclose(out4_l, x4_l + bias_4.reshape(1, C_4, 1, 1), atol=1e-6), \
        "4D tiled/masked mismatch"

    # --- Mixed dtype: bf16 x + f32 bias promotes to f32 (PyTorch-like) ------
    xb = jax.random.normal(k_xb, (N, C), dtype=jnp.bfloat16)
    outb = jax.block_until_ready(add_bias(xb, bias_param))
    refb = xb.astype(jnp.float32) + bias_vec.reshape(1, C)
    assert outb.dtype == jnp.float32
    assert jnp.allclose(outb, refb, atol=1e-6), "mixed-dtype mismatch"

    print("KERNEL_OK")
</pallas_src>

<mosaic_0001>
module attributes {stable_mosaic.version = 11 : i64} {
  func.func @_add_bias_kernel(%arg0: i32, %arg1: i32, %arg2: memref<8x256xf32, #tpu.memory_space<vmem>>, %arg3: memref<8x1xf32, #tpu.memory_space<vmem>>, %arg4: memref<8x256xf32, #tpu.memory_space<vmem>>) attributes {dimension_semantics = [#tpu.dimension_semantics<parallel>, #tpu.dimension_semantics<parallel>], iteration_bounds = array<i64: 1, 1>, scalar_prefetch = 0 : i64, scratch_operands = 0 : i64, tpu.core_type = #tpu.core_type<tc>, window_params = [{transform_indices = @transform_0, window_bounds = array<i64: 8, 256>}, {transform_indices = @transform_1, window_bounds = array<i64: 8, 1>}, {transform_indices = @transform_2, window_bounds = array<i64: 8, 256>}]} {
    %c0 = arith.constant 0 : index
    %c0_0 = arith.constant 0 : index
    %0 = vector.load %arg2[%c0, %c0_0] : memref<8x256xf32, #tpu.memory_space<vmem>>, vector<8x256xf32>
    %c0_1 = arith.constant 0 : index
    %c0_2 = arith.constant 0 : index
    %1 = vector.load %arg3[%c0_1, %c0_2] : memref<8x1xf32, #tpu.memory_space<vmem>>, vector<8x1xf32>
    %2 = vector.broadcast %1 : vector<8x1xf32> to vector<8x256xf32>
    %3 = arith.addf %0, %2 : vector<8x256xf32>
    %c0_3 = arith.constant 0 : index
    %c0_4 = arith.constant 0 : index
    %4 = vector.load %arg4[%c0_3, %c0_4] : memref<8x256xf32, #tpu.memory_space<vmem>>, vector<8x256xf32>
    tpu.vector_store %arg4[%c0_3, %c0_4], %3 {strides = array<i32>} : memref<8x256xf32, #tpu.memory_space<vmem>>, vector<8x256xf32>,
    return
  }
  func.func @transform_0(%arg0: i32, %arg1: i32) -> (i32, i32) {
    %c0_i32 = arith.constant 0 : i32
    return %arg0, %arg1 : i32, i32
  }
  func.func @transform_1(%arg0: i32, %arg1: i32) -> (i32, i32) {
    %c0_i32 = arith.constant 0 : i32
    %c0_i32_0 = arith.constant 0 : i32
    return %arg0, %c0_i32 : i32, i32
  }
  func.func @transform_2(%arg0: i32, %arg1: i32) -> (i32, i32) {
    %c0_i32 = arith.constant 0 : i32
    return %arg0, %arg1 : i32, i32
  }
}

</mosaic_0001>

<llo_original>
// kernel: tpu_custom_call.1
$region0: #{tpu_custom_call.1}
  #allocation0 [shape = 'u32[]', space=smem, size = 0x4, offset = 0x4, fixed_abs, tag = 'smem constant byte address 0x4 - core index']
  #allocation1 [shape = 'u32[72,128]{1,0:T(1,128)}', space=vmem, size = 0x9000, scoped, tag = 'internal scratch']
  %s0 = inlined_call_operand.hbm [shape: f32[8,256], index: 0, kind: input, shape index: {}]
  %s1 = inlined_call_operand.vmem [shape: f32[8,1], index: 1, kind: input, shape index: {}]
  %s2 = inlined_call_operand.hbm [shape: f32[8,256], index: 2, kind: output, shape index: {}]
  %s3 = sld [smem:[#allocation0]]
  $region22: #{tpu_custom_call.1} parent=0
    _
  %s5 = ssub.s32 1, %s3
  %s6 = scalar_select 0, %s5, %s3
  $region1: #{tpu_custom_call.1} parent=0
    #allocation2 [shape = 'u8[8192]{0}', space=vmem, size = 0x2000, scoped, tag = 'input window, operand 0, single buffered']
    #allocation3 [shape = 's32[1]{0}', space=sflag, size = 0x4, scoped, tag = 'scoped memory for tpu_custom_call.1']
    #allocation4 [shape = 's32[1]{0}', space=sflag, size = 0x4, scoped, tag = 'scoped memory for tpu_custom_call.1']
    #allocation5 [shape = 'u8[8192]{0}', space=vmem, size = 0x2000, scoped, tag = 'output window, operand 0, single buffered']
    %7 = vsyncpa [#allocation3], 0
    %8 = vsyncpa [#allocation4], 0
    // Predicated region
    $region2: #{tpu_custom_call.1} parent=1 // pred_check
      _
    $region3: #{tpu_custom_call.1} parent=1 // pred_check_branch
      %10 = sbr.rel (0) target = $region5
    $region4: #{tpu_custom_call.1} parent=1 // pred_region
      %12 = vsyncadd [#allocation3], 0
      %s14 = sshll.u32 %s0, 4
      %s15 = int_to_ptr.hbm [resolvable:$true] %s14
      %s16 = sshll.u32 [#allocation2], 4
      %s17 = int_to_ptr.vmem [resolvable:$true] %s16
      %19 = dma.hbm_to_vmem [thread:$0]  %s15, 256, %s17, [#allocation3]
    $region5: #{tpu_custom_call.1} parent=1 // pred_fallthru
      _
    // Predicated region
    $region6: #{tpu_custom_call.1} parent=1 // pred_check
      _
    $region7: #{tpu_custom_call.1} parent=1 // pred_check_branch
      %21 = sbr.rel (0) target = $region9
    $region8: #{tpu_custom_call.1} parent=1 // pred_region
      _
    $region9: #{tpu_custom_call.1} parent=1 // pred_fallthru
      _
    // Predicated region
    $region10: #{tpu_custom_call.1} parent=1 // pred_check
      _
    $region11: #{tpu_custom_call.1} parent=1 // pred_check_branch
      %23 = sbr.rel (0) target = $region13
    $region12: #{tpu_custom_call.1} parent=1 // pred_region
      %25 = dma.done [#allocation3], 256
    $region13: #{tpu_custom_call.1} parent=1 // pred_fallthru
      _
    %v26 = vld [vmem:[#allocation2] sm:$0xff]
    %v27 = vld [vmem:[#allocation2 + $0x8] sm:$0xff]
    %v28 = vld [vmem:[%s1] sm:$0xff]
    %30 = vset.pattern.permute.xlu0 0
    %31 = vperm.xlu0 %30, %v28
    %v32 = vpop.permute.xlu0 %31
    %v34 = vadd.f32 %v26, %v32
    %v35 = vadd.f32 %v27, %v32
    %36 = vst [vmem:[#allocation5] sm:$0xff] %v34
    %37 = vst [vmem:[#allocation5 + $0x8] sm:$0xff] %v35
    // Predicated region
    $region14: #{tpu_custom_call.1} parent=1 // pred_check
      _
    $region15: #{tpu_custom_call.1} parent=1 // pred_check_branch
      %39 = sbr.rel (0) target = $region17
    $region16: #{tpu_custom_call.1} parent=1 // pred_region
      %41 = vsyncadd [#allocation4], 0
      %s43 = sshll.u32 [#allocation5], 4
      %s44 = int_to_ptr.vmem [resolvable:$true] %s43
      %s45 = sshll.u32 %s2, 4
      %s46 = int_to_ptr.hbm [resolvable:$true] %s45
      %48 = dma.vmem_to_hbm [thread:$0]  %s44, 256, %s46, [#allocation4]
    $region17: #{tpu_custom_call.1} parent=1 // pred_fallthru
      _
    // Predicated region
    $region18: #{tpu_custom_call.1} parent=1 // pred_check
      _
    $region19: #{tpu_custom_call.1} parent=1 // pred_check_branch
      %50 = sbr.rel (0) target = $region21
    $region20: #{tpu_custom_call.1} parent=1 // pred_region
      %52 = dma.done [#allocation4], 256
    $region21: #{tpu_custom_call.1} parent=1 // pred_fallthru
      _
    %53 = vsyncpa [#allocation3], 1
    %54 = vsyncpa [#allocation4], 1

</llo_original>
